<compile_context>
chip_gen: v5e
topology: v5e:2x2
jax: 0.10.0
libtpu: 0.0.40
codegen_flags: <defaults>
</compile_context>

<pallas_src>
import jax
import jax.numpy as jnp
from jax.experimental import pallas as pl
from jax.experimental.pallas import tpu as pltpu


_LANE = 128
# Scoped-VMEM limit: above the 16/32 MiB defaults, safely below v7x's 64 MiB.
_VMEM_LIMIT_BYTES = 48 * 1024 * 1024
# Budget for the streamed (double-buffered) activation + output tiles.
_TILE_BUDGET_BYTES = 24 * 1024 * 1024
_MAX_TILE_N = 1024


def _round_up(x, m):
    return ((x + m - 1) // m) * m


def _pick_tile_n(n, bytes_per_row, *, max_tile=_MAX_TILE_N, budget=_TILE_BUDGET_BYTES):
    """Largest row tile (multiple of 8) whose double-buffered streams fit the
    VMEM budget; shrink so the grid has >= 2 steps when there is enough work
    (keeps both v7x TensorCores busy; harmless on v5e/v6e)."""
    cap = max(8, (budget // max(bytes_per_row, 1)) // 8 * 8)
    tile = min(max_tile, cap)
    if n <= 8:
        return 8
    if n <= tile:
        tile = min(tile, max(8, _round_up(pl.cdiv(n, 2), 8)))
    return tile


def _prep_linear(w, b, lane=_LANE):
    """torch Linear layout (K, C) weight / (K,) bias ->
       lane-padded bf16 (C, Kp) weight and f32 (1, Kp) bias."""
    k, c = w.shape
    kp = _round_up(max(k, 1), lane)
    w_t = jnp.zeros((c, kp), jnp.bfloat16).at[:, :k].set(
        jnp.transpose(w).astype(jnp.bfloat16))
    b_p = jnp.zeros((1, kp), jnp.float32).at[:, :k].set(
        b.reshape(1, k).astype(jnp.float32))
    return w_t, b_p, k


# ----------------------------------------------------------------------------
# Kernels
# ----------------------------------------------------------------------------
def _linear_kernel(x_ref, w_ref, b_ref, o_ref):
    # (TILE_N, C)bf16 @ (C, Kp)bf16 -> f32 accumulation on the MXU.
    acc = jnp.dot(x_ref[...], w_ref[...], preferred_element_type=jnp.float32)
    o_ref[...] = (acc + b_ref[...]).astype(o_ref.dtype)


def _fused_predictor_kernel(xc_ref, xr_ref, wc_ref, bc_ref, wb_ref, bb_ref,
                            cls_ref, bbox_ref):
    # cls head on xc and narrow bbox head on xr, one pipelined grid pass.
    cls_acc = jnp.dot(xc_ref[...], wc_ref[...], preferred_element_type=jnp.float32)
    cls_ref[...] = (cls_acc + bc_ref[...]).astype(cls_ref.dtype)
    bbox_acc = jnp.dot(xr_ref[...], wb_ref[...], preferred_element_type=jnp.float32)
    bbox_ref[...] = (bbox_acc + bb_ref[...]).astype(bbox_ref.dtype)


# ----------------------------------------------------------------------------
# Wrappers
# ----------------------------------------------------------------------------
def pallas_linear(x, w_t, b_p, k_out):
    """y = x @ w_t[:, :k_out] + b, tiled over rows of x (ragged last block)."""
    n, c = x.shape
    kp = w_t.shape[1]
    x_bf = x.astype(jnp.bfloat16)  # ideally the producer already emits bf16

    in_b, out_b = 2, 4
    per_row = 2 * c * in_b + 2 * kp * out_b          # 2 pipeline bufs per stream
    tile_n = _pick_tile_n(n, per_row)
    grid = (pl.cdiv(n, tile_n),)

    cost = pl.CostEstimate(
        flops=2 * n * c * kp,
        transcendentals=0,
        bytes_accessed=n * c * in_b + c * kp * in_b + kp * out_b + n * kp * out_b,
    )

    out = pl.pallas_call(
        _linear_kernel,
        out_shape=jax.ShapeDtypeStruct((n, kp), jnp.float32),
        grid=grid,
        in_specs=[
            pl.BlockSpec((tile_n, c), lambda i: (i, 0)),   # streamed activations
            pl.BlockSpec((c, kp), lambda i: (0, 0)),       # resident weight
            pl.BlockSpec((1, kp), lambda i: (0, 0)),       # resident bias
        ],
        out_specs=pl.BlockSpec((tile_n, kp), lambda i: (i, 0)),
        compiler_params=pltpu.CompilerParams(
            dimension_semantics=("parallel",),
            vmem_limit_bytes=_VMEM_LIMIT_BYTES,
        ),
        cost_estimate=cost,
    )(x_bf, w_t, b_p)
    return out[:, :k_out]


def _fused_cls_bbox(xc, xr, wc_t, bc_p, kc, wb_t, bb_p, kb):
    """cls_score(xc) and the NARROW bbox_pred(xr) in a single pipelined pass."""
    n, c = xc.shape
    assert xr.shape == (n, c), "xc and xr must have the same (N, C) shape"
    kcp, kbp = wc_t.shape[1], wb_t.shape[1]
    xc_bf = xc.astype(jnp.bfloat16)
    xr_bf = xr.astype(jnp.bfloat16)

    in_b, out_b = 2, 4
    per_row = 2 * 2 * c * in_b + 2 * (kcp + kbp) * out_b
    tile_n = _pick_tile_n(n, per_row)
    grid = (pl.cdiv(n, tile_n),)

    cost = pl.CostEstimate(
        flops=2 * n * c * (kcp + kbp),
        transcendentals=0,
        bytes_accessed=(2 * n * c * in_b + c * (kcp + kbp) * in_b
                        + (kcp + kbp) * out_b + n * (kcp + kbp) * out_b),
    )

    cls_out, bbox_out = pl.pallas_call(
        _fused_predictor_kernel,
        out_shape=(
            jax.ShapeDtypeStruct((n, kcp), jnp.float32),
            jax.ShapeDtypeStruct((n, kbp), jnp.float32),
        ),
        grid=grid,
        in_specs=[
            pl.BlockSpec((tile_n, c), lambda i: (i, 0)),   # xc tile
            pl.BlockSpec((tile_n, c), lambda i: (i, 0)),   # xr tile
            pl.BlockSpec((c, kcp), lambda i: (0, 0)),      # cls weight (resident)
            pl.BlockSpec((1, kcp), lambda i: (0, 0)),      # cls bias
            pl.BlockSpec((c, kbp), lambda i: (0, 0)),      # bbox weight (narrow, resident)
            pl.BlockSpec((1, kbp), lambda i: (0, 0)),      # bbox bias
        ],
        out_specs=(
            pl.BlockSpec((tile_n, kcp), lambda i: (i, 0)),
            pl.BlockSpec((tile_n, kbp), lambda i: (i, 0)),
        ),
        compiler_params=pltpu.CompilerParams(
            dimension_semantics=("parallel",),
            vmem_limit_bytes=_VMEM_LIMIT_BYTES,
        ),
        cost_estimate=cost,
    )(xc_bf, xr_bf, wc_t, bc_p, wb_t, bb_p)
    return cls_out[:, :kc], bbox_out[:, :kb]


# ----------------------------------------------------------------------------
# Module-level init / prep / forward
# ----------------------------------------------------------------------------
def init_fpn_predictor_isda(key, in_channels, num_classes):
    """Matches nn.init in FPNPredictorISDA.__init__ (std 0.01 / 0.001, zero bias)."""
    kwc, kwb = jax.random.split(key)
    return {
        "w_cls": 0.01 * jax.random.normal(kwc, (num_classes, in_channels), jnp.float32),
        "b_cls": jnp.zeros((num_classes,), jnp.float32),
        "w_bbox": 0.001 * jax.random.normal(kwb, (num_classes, in_channels), jnp.float32),
        "b_bbox": jnp.zeros((num_classes,), jnp.float32),
    }


def prepare_fpn_predictor_isda(params):
    """Hoisted weight prep (transpose + lane-pad + bf16 cast), done once."""
    wc_t, bc_p, kc = _prep_linear(params["w_cls"], params["b_cls"])
    wb_t, bb_p, kb = _prep_linear(params["w_bbox"], params["b_bbox"])
    return {"wc_t": wc_t, "bc_p": bc_p, "kc": kc,
            "wb_t": wb_t, "bb_p": bb_p, "kb": kb}


def fpn_predictor_isda_forward(prepped, xc, xr=None, label=None):
    if xr is not None:
        scores, bbox_narrow = _fused_cls_bbox(
            xc, xr, prepped["wc_t"], prepped["bc_p"], prepped["kc"],
            prepped["wb_t"], prepped["bb_p"], prepped["kb"])
        # bbox_pred(xr).repeat(1, 4): the head is computed once (narrow) and the
        # identical columns are replicated along lanes here — cheap copy work
        # instead of 4x the MXU FLOPs and 4x the output HBM writes.
        bbox_deltas = jnp.tile(bbox_narrow, (1, 4))
        # TODO(synk): ISDAaug(self.cls_score, scores, xc, label, 5) is not defined
        # in the provided spec; returning the raw cls scores in its place.
        output = scores
        return output, bbox_deltas
    else:
        # Inference: batch all FPN levels into ONE pallas_call, then split.
        sizes = [f.shape[0] for f in xc]
        x_all = jnp.concatenate(xc, axis=0) if len(xc) > 1 else xc[0]
        y_all = pallas_linear(x_all, prepped["wc_t"], prepped["bc_p"], prepped["kc"])
        outs, off = [], 0
        for s in sizes:
            outs.append(y_all[off:off + s])
            off += s
        return outs


if __name__ == "__main__":
    in_channels = 4
    num_classes = 8
    n_props = 6  # deliberately not a multiple of 8 to exercise the ragged block

    key = jax.random.PRNGKey(0)
    kparam, kxc, kxr, kfeat = jax.random.split(key, 4)

    params = init_fpn_predictor_isda(kparam, in_channels, num_classes)
    prepped = prepare_fpn_predictor_isda(params)

    # ---- training branch (xr is not None) -----------------------------------
    xc = jax.random.normal(kxc, (n_props, in_channels), dtype=jnp.float32)
    xr = jax.random.normal(kxr, (n_props, in_channels), dtype=jnp.float32)
    label = jnp.zeros((n_props,), dtype=jnp.int32)  # only consumed by ISDAaug

    output, bbox_deltas = fpn_predictor_isda_forward(prepped, xc, xr=xr, label=label)

    # ---- inference branch (xr is None): list of per-level features ----------
    feat_sizes = (2, 5, 3)
    feats = [jax.random.normal(k, (n, in_channels), dtype=jnp.float32)
             for k, n in zip(jax.random.split(kfeat, len(feat_sizes)), feat_sizes)]
    cls_list = fpn_predictor_isda_forward(prepped, feats)

    jax.block_until_ready((output, bbox_deltas, *cls_list))

    # ---- plain-JAX reference (same semantics as the PyTorch forward) --------
    # Inputs/weights go through the MXU in bf16 (f32 accumulation), so compare
    # against the f32 reference with a bf16-appropriate tolerance.
    ref_scores = xc @ params["w_cls"].T + params["b_cls"]
    ref_bbox = jnp.tile(xr @ params["w_bbox"].T + params["b_bbox"], (1, 4))
    assert output.shape == (n_props, num_classes)
    assert bbox_deltas.shape == (n_props, 4 * num_classes)
    assert jnp.allclose(output, ref_scores, atol=1e-2)
    assert jnp.allclose(bbox_deltas, ref_bbox, atol=1e-2)
    for f, c in zip(feats, cls_list):
        ref_c = f @ params["w_cls"].T + params["b_cls"]
        assert c.shape == (f.shape[0], num_classes)
        assert jnp.allclose(c, ref_c, atol=1e-2)

    print("KERNEL_OK")
</pallas_src>

<mosaic_0001>
module attributes {stable_mosaic.version = 11 : i64} {
  func.func @_fused_predictor_kernel(%arg0: i32, %arg1: memref<8x4xbf16, #tpu.memory_space<vmem>>, %arg2: memref<8x4xbf16, #tpu.memory_space<vmem>>, %arg3: memref<4x128xbf16, #tpu.memory_space<vmem>>, %arg4: memref<1x128xf32, #tpu.memory_space<vmem>>, %arg5: memref<4x128xbf16, #tpu.memory_space<vmem>>, %arg6: memref<1x128xf32, #tpu.memory_space<vmem>>, %arg7: memref<8x128xf32, #tpu.memory_space<vmem>>, %arg8: memref<8x128xf32, #tpu.memory_space<vmem>>) attributes {dimension_semantics = [#tpu.dimension_semantics<parallel>], iteration_bounds = array<i64: 1>, scalar_prefetch = 0 : i64, scratch_operands = 0 : i64, tpu.core_type = #tpu.core_type<tc>, window_params = [{transform_indices = @transform_0, window_bounds = array<i64: 8, 4>}, {transform_indices = @transform_1, window_bounds = array<i64: 8, 4>}, {pipeline_mode = #tpu.pipeline_mode<synchronous>, transform_indices = @transform_2, window_bounds = array<i64: 4, 128>}, {pipeline_mode = #tpu.pipeline_mode<synchronous>, transform_indices = @transform_3, window_bounds = array<i64: 1, 128>}, {pipeline_mode = #tpu.pipeline_mode<synchronous>, transform_indices = @transform_4, window_bounds = array<i64: 4, 128>}, {pipeline_mode = #tpu.pipeline_mode<synchronous>, transform_indices = @transform_5, window_bounds = array<i64: 1, 128>}, {transform_indices = @transform_6, window_bounds = array<i64: 8, 128>}, {transform_indices = @transform_7, window_bounds = array<i64: 8, 128>}]} {
    %c0 = arith.constant 0 : index
    %c0_0 = arith.constant 0 : index
    %0 = vector.load %arg1[%c0, %c0_0] : memref<8x4xbf16, #tpu.memory_space<vmem>>, vector<8x4xbf16>
    %c0_1 = arith.constant 0 : index
    %c0_2 = arith.constant 0 : index
    %1 = vector.load %arg3[%c0_1, %c0_2] : memref<4x128xbf16, #tpu.memory_space<vmem>>, vector<4x128xbf16>
    %cst = arith.constant dense<0.000000e+00> : vector<8x128xf32>
    %2 = tpu.matmul %0, %1, %cst {dimension_numbers = #tpu.dot_dimension_numbers<[1], [0], [0], [1], [0, 0, 1, 1], [], []>} : vector<8x4xbf16>, vector<4x128xbf16>, vector<8x128xf32> -> vector<8x128xf32>
    %c0_3 = arith.constant 0 : index
    %c0_4 = arith.constant 0 : index
    %3 = vector.load %arg4[%c0_3, %c0_4] : memref<1x128xf32, #tpu.memory_space<vmem>>, vector<1x128xf32>
    %4 = vector.broadcast %3 : vector<1x128xf32> to vector<8x128xf32>
    %5 = arith.addf %2, %4 : vector<8x128xf32>
    %c0_5 = arith.constant 0 : index
    %c0_6 = arith.constant 0 : index
    %6 = vector.load %arg7[%c0_5, %c0_6] : memref<8x128xf32, #tpu.memory_space<vmem>>, vector<8x128xf32>
    tpu.vector_store %arg7[%c0_5, %c0_6], %5 {strides = array<i32>} : memref<8x128xf32, #tpu.memory_space<vmem>>, vector<8x128xf32>,
    %c0_7 = arith.constant 0 : index
    %c0_8 = arith.constant 0 : index
    %7 = vector.load %arg2[%c0_7, %c0_8] : memref<8x4xbf16, #tpu.memory_space<vmem>>, vector<8x4xbf16>
    %c0_9 = arith.constant 0 : index
    %c0_10 = arith.constant 0 : index
    %8 = vector.load %arg5[%c0_9, %c0_10] : memref<4x128xbf16, #tpu.memory_space<vmem>>, vector<4x128xbf16>
    %cst_11 = arith.constant dense<0.000000e+00> : vector<8x128xf32>
    %9 = tpu.matmul %7, %8, %cst_11 {dimension_numbers = #tpu.dot_dimension_numbers<[1], [0], [0], [1], [0, 0, 1, 1], [], []>} : vector<8x4xbf16>, vector<4x128xbf16>, vector<8x128xf32> -> vector<8x128xf32>
    %c0_12 = arith.constant 0 : index
    %c0_13 = arith.constant 0 : index
    %10 = vector.load %arg6[%c0_12, %c0_13] : memref<1x128xf32, #tpu.memory_space<vmem>>, vector<1x128xf32>
    %11 = vector.broadcast %10 : vector<1x128xf32> to vector<8x128xf32>
    %12 = arith.addf %9, %11 : vector<8x128xf32>
    %c0_14 = arith.constant 0 : index
    %c0_15 = arith.constant 0 : index
    %13 = vector.load %arg8[%c0_14, %c0_15] : memref<8x128xf32, #tpu.memory_space<vmem>>, vector<8x128xf32>
    tpu.vector_store %arg8[%c0_14, %c0_15], %12 {strides = array<i32>} : memref<8x128xf32, #tpu.memory_space<vmem>>, vector<8x128xf32>,
    return
  }
  func.func @transform_0(%arg0: i32) -> (i32, i32) {
    %c0_i32 = arith.constant 0 : i32
    %c0_i32_0 = arith.constant 0 : i32
    return %arg0, %c0_i32 : i32, i32
  }
  func.func @transform_1(%arg0: i32) -> (i32, i32) {
    %c0_i32 = arith.constant 0 : i32
    %c0_i32_0 = arith.constant 0 : i32
    return %arg0, %c0_i32 : i32, i32
  }
  func.func @transform_2(%arg0: i32) -> (i32, i32) {
    %c0_i32 = arith.constant 0 : i32
    %c0_i32_0 = arith.constant 0 : i32
    %c0_i32_1 = arith.constant 0 : i32
    return %c0_i32, %c0_i32_0 : i32, i32
  }
  func.func @transform_3(%arg0: i32) -> (i32, i32) {
    %c0_i32 = arith.constant 0 : i32
    %c0_i32_0 = arith.constant 0 : i32
    %c0_i32_1 = arith.constant 0 : i32
    return %c0_i32, %c0_i32_0 : i32, i32
  }
  func.func @transform_4(%arg0: i32) -> (i32, i32) {
    %c0_i32 = arith.constant 0 : i32
    %c0_i32_0 = arith.constant 0 : i32
    %c0_i32_1 = arith.constant 0 : i32
    return %c0_i32, %c0_i32_0 : i32, i32
  }
  func.func @transform_5(%arg0: i32) -> (i32, i32) {
    %c0_i32 = arith.constant 0 : i32
    %c0_i32_0 = arith.constant 0 : i32
    %c0_i32_1 = arith.constant 0 : i32
    return %c0_i32, %c0_i32_0 : i32, i32
  }
  func.func @transform_6(%arg0: i32) -> (i32, i32) {
    %c0_i32 = arith.constant 0 : i32
    %c0_i32_0 = arith.constant 0 : i32
    return %arg0, %c0_i32 : i32, i32
  }
  func.func @transform_7(%arg0: i32) -> (i32, i32) {
    %c0_i32 = arith.constant 0 : i32
    %c0_i32_0 = arith.constant 0 : i32
    return %arg0, %c0_i32 : i32, i32
  }
}

</mosaic_0001>

<llo_original>
// kernel: tpu_custom_call.1
$region0: #{tpu_custom_call.1}
  #allocation0 [shape = 'u32[]', space=smem, size = 0x4, offset = 0x4, fixed_abs, tag = 'smem constant byte address 0x4 - core index']
  #allocation1 [shape = 'u32[72,128]{1,0:T(1,128)}', space=vmem, size = 0x9000, scoped, tag = 'internal scratch']
  %s0 = inlined_call_operand.vmem [shape: bf16[6,4], index: 0, kind: input, shape index: {}]
  %s1 = inlined_call_operand.vmem [shape: bf16[6,4], index: 1, kind: input, shape index: {}]
  %s2 = inlined_call_operand.vmem [shape: bf16[4,128], index: 2, kind: input, shape index: {}]
  %s3 = inlined_call_operand.vmem [shape: f32[1,128], index: 3, kind: input, shape index: {}]
  %s4 = inlined_call_operand.vmem [shape: bf16[4,128], index: 4, kind: input, shape index: {}]
  %s5 = inlined_call_operand.vmem [shape: f32[1,128], index: 5, kind: input, shape index: {}]
  %s6 = inlined_call_operand.hbm [shape: f32[6,128], index: 6, kind: output, shape index: {0}]
  %s7 = inlined_call_operand.hbm [shape: f32[6,128], index: 7, kind: output, shape index: {1}]
  %8 = xla_tuple %s6, %s7
  %s9 = sld [smem:[#allocation0]]
  $region42: #{tpu_custom_call.1} parent=0
    _
  %s11 = ssub.s32 1, %s9
  %s12 = scalar_select 0, %s11, %s9
  $region1: #{tpu_custom_call.1} parent=0
    #allocation2 [shape = 'u8[4096]{0}', space=vmem, size = 0x1000, scoped, tag = 'output window, operand 0, single buffered']
    #allocation3 [shape = 's32[1]{0}', space=sflag, size = 0x4, scoped, tag = 'scoped memory for tpu_custom_call.1']
    #allocation4 [shape = 'u8[4096]{0}', space=vmem, size = 0x1000, scoped, tag = 'output window, operand 1, single buffered']
    #allocation5 [shape = 's32[1]{0}', space=sflag, size = 0x4, scoped, tag = 'scoped memory for tpu_custom_call.1']
    %13 = vsyncpa [#allocation3], 0
    %14 = vsyncpa [#allocation5], 0
    // Predicated region
    $region2: #{tpu_custom_call.1} parent=1 // pred_check
      _
    $region3: #{tpu_custom_call.1} parent=1 // pred_check_branch
      %16 = sbr.rel (0) target = $region5
    $region4: #{tpu_custom_call.1} parent=1 // pred_region
      _
    $region5: #{tpu_custom_call.1} parent=1 // pred_fallthru
      _
    // Predicated region
    $region6: #{tpu_custom_call.1} parent=1 // pred_check
      _
    $region7: #{tpu_custom_call.1} parent=1 // pred_check_branch
      %18 = sbr.rel (0) target = $region9
    $region8: #{tpu_custom_call.1} parent=1 // pred_region
      _
    $region9: #{tpu_custom_call.1} parent=1 // pred_fallthru
      _
    // Predicated region
    $region10: #{tpu_custom_call.1} parent=1 // pred_check
      _
    $region11: #{tpu_custom_call.1} parent=1 // pred_check_branch
      %20 = sbr.rel (0) target = $region13
    $region12: #{tpu_custom_call.1} parent=1 // pred_region
      _
    $region13: #{tpu_custom_call.1} parent=1 // pred_fallthru
      _
    // Predicated region
    $region14: #{tpu_custom_call.1} parent=1 // pred_check
      _
    $region15: #{tpu_custom_call.1} parent=1 // pred_check_branch
      %22 = sbr.rel (0) target = $region17
    $region16: #{tpu_custom_call.1} parent=1 // pred_region
      _
    $region17: #{tpu_custom_call.1} parent=1 // pred_fallthru
      _
    // Predicated region
    $region18: #{tpu_custom_call.1} parent=1 // pred_check
      _
    $region19: #{tpu_custom_call.1} parent=1 // pred_check_branch
      %24 = sbr.rel (0) target = $region21
    $region20: #{tpu_custom_call.1} parent=1 // pred_region
      _
    $region21: #{tpu_custom_call.1} parent=1 // pred_fallthru
      _
    // Predicated region
    $region22: #{tpu_custom_call.1} parent=1 // pred_check
      _
    $region23: #{tpu_custom_call.1} parent=1 // pred_check_branch
      %26 = sbr.rel (0) target = $region25
    $region24: #{tpu_custom_call.1} parent=1 // pred_region
      _
    $region25: #{tpu_custom_call.1} parent=1 // pred_fallthru
      _
    %v28 = vld [vmem:[%s0] sm:$0xf]
    %v29 = vld [vmem:[%s2] sm:$0x3]
    %v30 = vld [vmem:[%s3] sm:$0x1]
    %v32 = vperm.slane %v30, 0
    %vm34 = vcmask 31744
    %v36 = vsel %vm34, %v28, 0
    %vm38 = vcmask 1041408
    %v40 = vsel %vm38, %v29, 0
    %42 = vmatpush.bf16.msra.mxu0 0
    %43 = vmatpush.bf16.msra.mxu0 0
    %44 = vmatpush.bf16.msra.mxu0 0
    %45 = vmatpush.bf16.msra.mxu0 0
    %46 = vmatpush.bf16.msra.mxu0 0
    %47 = vmatpush.bf16.msra.mxu0 0
    %48 = vmatpush.bf16.msra.mxu0 0
    %49 = vmatpush.bf16.msra.mxu0 %v40
    %50 = vmatmul.bf16.gmra.mxu0 %v36
    %v51 = vpop.f32.mrf.mxu0
    %v52 = vadd.f32 %v32, %v51
    %v53 = vpop.f32.mrf.mxu0
    %54 = vdwg.mxu0
    %55 = vst [vmem:[#allocation2] sm:$0xff] %v52
    %v56 = vld [vmem:[%s1] sm:$0xf]
    %v57 = vld [vmem:[%s4] sm:$0x3]
    %v58 = vld [vmem:[%s5] sm:$0x1]
    %v60 = vperm.slane %v58, 0
    %v63 = vsel %vm34, %v56, 0
    %v66 = vsel %vm38, %v57, 0
    %68 = vmatpush.bf16.msra.mxu0 0
    %69 = vmatpush.bf16.msra.mxu0 0
    %70 = vmatpush.bf16.msra.mxu0 0
    %71 = vmatpush.bf16.msra.mxu0 0
    %72 = vmatpush.bf16.msra.mxu0 0
    %73 = vmatpush.bf16.msra.mxu0 0
    %74 = vmatpush.bf16.msra.mxu0 0
    %75 = vmatpush.bf16.msra.mxu0 %v66
    %76 = vmatmul.bf16.gmra.mxu0 %v63
    %v77 = vpop.f32.mrf.mxu0
    %v78 = vadd.f32 %v60, %v77
    %v79 = vpop.f32.mrf.mxu0
    %80 = vdwg.mxu0
    %81 = vst [vmem:[#allocation4] sm:$0xff] %v78
    // Predicated region
    $region26: #{tpu_custom_call.1} parent=1 // pred_check
      _
    $region27: #{tpu_custom_call.1} parent=1 // pred_check_branch
      %83 = sbr.rel (0) target = $region29
    $region28: #{tpu_custom_call.1} parent=1 // pred_region
      %85 = vsyncadd [#allocation3], 0
      %s87 = sshll.u32 [#allocation2], 4
      %s88 = int_to_ptr.vmem [resolvable:$true] %s87
      %s89 = sshll.u32 %s6, 4
      %s90 = int_to_ptr.hbm [resolvable:$true] %s89
      %92 = dma.vmem_to_hbm [thread:$0]  %s88, 128, %s90, [#allocation3]
    $region29: #{tpu_custom_call.1} parent=1 // pred_fallthru
      _
    // Predicated region
    $region30: #{tpu_custom_call.1} parent=1 // pred_check
      _
    $region31: #{tpu_custom_call.1} parent=1 // pred_check_branch
      %94 = sbr.rel (0) target = $region33
    $region32: #{tpu_custom_call.1} parent=1 // pred_region
      %96 = vsyncadd [#allocation5], 0
      %s98 = sshll.u32 [#allocation4], 4
      %s99 = int_to_ptr.vmem [resolvable:$true] %s98
      %s100 = sshll.u32 %s7, 4
      %s101 = int_to_ptr.hbm [resolvable:$true] %s100
      %103 = dma.vmem_to_hbm [thread:$0]  %s99, 128, %s101, [#allocation5]
    $region33: #{tpu_custom_call.1} parent=1 // pred_fallthru
      _
    // Predicated region
    $region34: #{tpu_custom_call.1} parent=1 // pred_check
      _
    $region35: #{tpu_custom_call.1} parent=1 // pred_check_branch
      %105 = sbr.rel (0) target = $region37
    $region36: #{tpu_custom_call.1} parent=1 // pred_region
      %107 = dma.done [#allocation3], 128
    $region37: #{tpu_custom_call.1} parent=1 // pred_fallthru
      _
    // Predicated region
    $region38: #{tpu_custom_call.1} parent=1 // pred_check
      _
    $region39: #{tpu_custom_call.1} parent=1 // pred_check_branch
      %109 = sbr.rel (0) target = $region41
    $region40: #{tpu_custom_call.1} parent=1 // pred_region
      %111 = dma.done [#allocation5], 128
    $region41: #{tpu_custom_call.1} parent=1 // pred_fallthru
      _
    %112 = vsyncpa [#allocation3], 1
    %113 = vsyncpa [#allocation5], 1

</llo_original>
